<compile_context>
chip_gen: v5e
topology: v5e:2x2
jax: 0.10.0
libtpu: 0.0.40
codegen_flags: <defaults>
</compile_context>

<pallas_src>
import functools

import jax
import jax.numpy as jnp
from jax import lax
from jax.experimental import pallas as pl
from jax.experimental.pallas import tpu as pltpu

LANE = 128
SUB_ROWS = 64     # rows per inner accumulation slice (keeps live vregs ~32)
MAX_CHUNKS = 2    # leading "parallel" grid axis (2nd TensorCore on v7x)
# TODO(synk): on v7x, verify via xprof that the leading "parallel" axis is
# actually core-sharded; if not, switch it to pltpu.CORE_PARALLEL / pl.core_map.


def _round_up(x, m):
    return ((x + m - 1) // m) * m


def _nse_partial_kernel(pred_ref, targ_ref, shift_ref, out_ref, *,
                        nblocks, tail_valid, sub_rows):
    """Accumulate partial sums into the chunk-resident (3, 8, 128) out block.

    out_ref[0]: sum((t - p)^2)      (numerator)
    out_ref[1]: sum(t - c)          (shifted first moment,  c = t[0])
    out_ref[2]: sum((t - c)^2)      (shifted second moment)
    """
    j = pl.program_id(1)
    blk = pl.program_id(0) * pl.num_programs(1) + j   # logical block index

    @pl.when(j == 0)
    def _():
        out_ref[...] = jnp.zeros_like(out_ref)

    br = pred_ref.shape[0]                  # static block row count
    n_sub = br // sub_rows                  # static inner trip count
    full_tail = tail_valid == br * LANE     # static: last block fully valid
    shift = shift_ref[0]

    def accum(i, mask_limit=None):
        # `i` is traced on the fast path, a static Python int on the tail path.
        start = i * sub_rows
        if not isinstance(start, int):
            start = pl.multiple_of(start, sub_rows)
        p = pred_ref[pl.ds(start, sub_rows), :].astype(jnp.float32)
        t = targ_ref[pl.ds(start, sub_rows), :].astype(jnp.float32)
        d = t - p
        tc = t - shift
        if mask_limit is not None:
            # Static, sub-slice-local threshold.  Keep this a SELECT (not a
            # multiply-by-mask): lanes past the real data may hold garbage
            # NaN/Inf from the partial boundary block.
            row_ids = lax.broadcasted_iota(jnp.int32, (sub_rows, LANE), 0)
            lane_ids = lax.broadcasted_iota(jnp.int32, (sub_rows, LANE), 1)
            valid = (row_ids * LANE + lane_ids) < mask_limit
            d = jnp.where(valid, d, 0.0)
            tc = jnp.where(valid, tc, 0.0)
        # Pure VPU work: fold (sub_rows, 128) into the (8, 128) accumulators.
        out_ref[0] += (d * d).reshape(-1, 8, LANE).sum(axis=0)
        out_ref[1] += tc.reshape(-1, 8, LANE).sum(axis=0)
        out_ref[2] += (tc * tc).reshape(-1, 8, LANE).sum(axis=0)

    # ---- fast path: fully-valid blocks, no masking at all -------------------
    last_full = nblocks if full_tail else nblocks - 1

    @pl.when(blk < last_full)
    def _():
        if n_sub == 1:
            accum(0)
        else:
            @pl.loop(0, n_sub)
            def _(i):
                accum(i)

    # ---- tail block: mask only the single partially-valid sub-slice ---------
    if not full_tail:
        full_subs = tail_valid // (sub_rows * LANE)       # static
        rem = tail_valid - full_subs * sub_rows * LANE    # static

        @pl.when(blk == nblocks - 1)
        def _():
            if full_subs == 1:
                accum(0)
            elif full_subs > 1:
                @pl.loop(0, full_subs)
                def _(i):
                    accum(i)
            if rem > 0:
                accum(full_subs, mask_limit=rem)
    # Steps whose clamped block index is past the end (blk >= nblocks) fall
    # through both conditions and do zero compute (their DMA re-reads the last
    # block, which stays in bounds).


def nse_loss(predictions, targets, alpha=None, *, block_rows=8192):
    """Pallas implementation of NashSutcliffeEfficiencyLoss.forward."""
    del alpha  # present in the PyTorch forward signature but never used by it

    p = predictions.reshape(-1)
    t = targets.reshape(-1)
    n = p.shape[0]

    # Shift reference for the numerically stable shifted-variance accumulation.
    shift = t[:1].astype(jnp.float32)          # (1,), lives in SMEM

    # Minimal ragged-tail pad to a multiple of LANE (no-op when aligned).
    rem = (-n) % LANE
    if rem:
        p = jnp.pad(p, (0, rem))
        t = jnp.pad(t, (0, rem))
    rows = (n + rem) // LANE
    p2 = p.reshape(rows, LANE)
    t2 = t.reshape(rows, LANE)

    # Sublane multiple required by the input dtypes (f32: 8, bf16: 16, int8: 32).
    def _mult(dt):
        return 8 * max(1, 4 // jnp.dtype(dt).itemsize)

    mult = max(_mult(p2.dtype), _mult(t2.dtype))
    br = max(mult, min(_round_up(block_rows, mult), _round_up(rows, mult)))
    sub_rows = min(SUB_ROWS, br)
    if br % sub_rows:
        br = _round_up(br, sub_rows)

    nblocks = (rows + br - 1) // br
    num_chunks = max(1, min(MAX_CHUNKS, nblocks))
    steps = (nblocks + num_chunks - 1) // num_chunks
    tail_valid = n - (nblocks - 1) * br * LANE   # valid elements in last block

    def io_map(c, j):
        # Clamp so over-covered steps re-read the last block (fully skipped
        # in-kernel), keeping every DMA in bounds.
        return (jnp.minimum(c * steps + j, nblocks - 1), 0)

    out = pl.pallas_call(
        functools.partial(_nse_partial_kernel, nblocks=nblocks,
                          tail_valid=tail_valid, sub_rows=sub_rows),
        out_shape=jax.ShapeDtypeStruct((num_chunks * 3, 8, LANE), jnp.float32),
        grid_spec=pltpu.PrefetchScalarGridSpec(
            num_scalar_prefetch=0,
            grid=(num_chunks, steps),
            in_specs=[
                pl.BlockSpec((br, LANE), io_map),
                pl.BlockSpec((br, LANE), io_map),
                pl.BlockSpec(memory_space=pltpu.MemorySpace.SMEM),
            ],
            out_specs=pl.BlockSpec((3, 8, LANE), lambda c, j: (c, 0, 0)),
        ),
        compiler_params=pltpu.CompilerParams(
            dimension_semantics=("parallel", "arbitrary"),
            vmem_limit_bytes=48 * 1024 * 1024),
    )(p2, t2, shift)

    # Tiny final cross-lane reduction + scalar formula in plain XLA.
    sums = out.reshape(num_chunks, 3, 8, LANE).sum(axis=(0, 2, 3))  # (3,)
    s_dd, s_tc, s_tc2 = sums[0], sums[1], sums[2]
    n_f = jnp.asarray(n, jnp.float32)
    denominator = s_tc2 - (s_tc * s_tc) / n_f   # == sum((t - mean(t))^2)
    # PyTorch forward returns 1 - nse == numerator / (denominator + 1e-8)
    return s_dd / (denominator + 1e-8)


def _reference(predictions, targets, alpha):
    del alpha
    p = predictions.reshape(-1).astype(jnp.float32)
    t = targets.reshape(-1).astype(jnp.float32)
    numerator = jnp.sum((t - p) ** 2)
    denominator = jnp.sum((t - jnp.mean(t)) ** 2)
    nse = 1.0 - numerator / (denominator + 1e-8)
    return 1.0 - nse


if __name__ == "__main__":
    key = jax.random.PRNGKey(0)
    k1, k2 = jax.random.split(key)
    # Small shapes consistent with a dense regression-style prediction map.
    predictions = jax.random.normal(k1, (2, 4, 16, 16), dtype=jnp.float32)
    targets = jax.random.normal(k2, (2, 4, 16, 16), dtype=jnp.float32)
    alpha = 0.5

    loss = jax.block_until_ready(nse_loss(predictions, targets, alpha))
    ref = jax.block_until_ready(_reference(predictions, targets, alpha))
    assert jnp.allclose(loss, ref, rtol=1e-4, atol=1e-4), (loss, ref)

    print("KERNEL_OK")
</pallas_src>

<mosaic_0001>
module attributes {stable_mosaic.version = 11 : i64} {
  func.func @_nse_partial_kernel(%arg0: i32, %arg1: i32, %arg2: memref<16x128xf32, #tpu.memory_space<vmem>>, %arg3: memref<16x128xf32, #tpu.memory_space<vmem>>, %arg4: memref<1xf32, #tpu.memory_space<smem>>, %arg5: memref<3x8x128xf32, #tpu.memory_space<vmem>>) attributes {dimension_semantics = [#tpu.dimension_semantics<parallel>, #tpu.dimension_semantics<arbitrary>], iteration_bounds = array<i64: 1, 1>, scalar_prefetch = 0 : i64, scratch_operands = 0 : i64, tpu.core_type = #tpu.core_type<tc>, window_params = [{transform_indices = @transform_0, window_bounds = array<i64: 16, 128>}, {transform_indices = @transform_1, window_bounds = array<i64: 16, 128>}, {transform_indices = @transform_2, window_bounds = array<i64: 1>}, {transform_indices = @transform_3, window_bounds = array<i64: 3, 8, 128>}]} {
    %c1_i32 = arith.constant 1 : i32
    %0 = arith.muli %arg0, %c1_i32 : i32
    %1 = arith.addi %0, %arg1 : i32
    %c0_i32 = arith.constant 0 : i32
    %2 = arith.cmpi eq, %arg1, %c0_i32 : i32
    %3 = arith.extui %2 : i1 to i32
    %c0_i32_0 = arith.constant 0 : i32
    %4 = arith.cmpi ne, %3, %c0_i32_0 : i32
    scf.if %4 {
      %cst = arith.constant 0.000000e+00 : f32
      %9 = vector.broadcast %cst : f32 to vector<3x8x128xf32>
      %c0_3 = arith.constant 0 : index
      %c0_4 = arith.constant 0 : index
      %c0_5 = arith.constant 0 : index
      %10 = vector.load %arg5[%c0_3, %c0_4, %c0_5] : memref<3x8x128xf32, #tpu.memory_space<vmem>>, vector<3x8x128xf32>
      tpu.vector_store %arg5[%c0_3, %c0_4, %c0_5], %9 {strides = array<i32>} : memref<3x8x128xf32, #tpu.memory_space<vmem>>, vector<3x8x128xf32>,
    } else {
    }
    %c0 = arith.constant 0 : index
    %5 = memref.load %arg4[%c0] : memref<1xf32, #tpu.memory_space<smem>>
    %c1_i32_1 = arith.constant 1 : i32
    %6 = arith.cmpi slt, %1, %c1_i32_1 : i32
    %7 = arith.extui %6 : i1 to i32
    %c0_i32_2 = arith.constant 0 : i32
    %8 = arith.cmpi ne, %7, %c0_i32_2 : i32
    scf.if %8 {
      %c0_3 = arith.constant 0 : index
      %c0_4 = arith.constant 0 : index
      %9 = vector.load %arg2[%c0_3, %c0_4] : memref<16x128xf32, #tpu.memory_space<vmem>>, vector<16x128xf32>
      %c0_5 = arith.constant 0 : index
      %c0_6 = arith.constant 0 : index
      %10 = vector.load %arg3[%c0_5, %c0_6] : memref<16x128xf32, #tpu.memory_space<vmem>>, vector<16x128xf32>
      %11 = arith.subf %10, %9 : vector<16x128xf32>
      %12 = vector.broadcast %5 : f32 to vector<16x128xf32>
      %13 = arith.subf %10, %12 : vector<16x128xf32>
      %c0_7 = arith.constant 0 : index
      %c0_8 = arith.constant 0 : index
      %c0_9 = arith.constant 0 : index
      %14 = vector.load %arg5[%c0_7, %c0_8, %c0_9] : memref<3x8x128xf32, #tpu.memory_space<vmem>>, vector<1x8x128xf32>
      %15 = vector.shape_cast %14 : vector<1x8x128xf32> to vector<8x128xf32>
      %16 = arith.mulf %11, %11 : vector<16x128xf32>
      %17 = vector.shape_cast %16 : vector<16x128xf32> to vector<2x8x128xf32>
      %cst = arith.constant dense<0.000000e+00> : vector<8x128xf32>
      %18 = vector.multi_reduction <add>, %17, %cst [0] : vector<2x8x128xf32> to vector<8x128xf32>
      %19 = arith.addf %15, %18 : vector<8x128xf32>
      %c0_10 = arith.constant 0 : index
      %c0_11 = arith.constant 0 : index
      %c0_12 = arith.constant 0 : index
      %20 = vector.load %arg5[%c0_10, %c0_11, %c0_12] : memref<3x8x128xf32, #tpu.memory_space<vmem>>, vector<1x8x128xf32>
      %21 = vector.shape_cast %20 : vector<1x8x128xf32> to vector<8x128xf32>
      %22 = vector.shape_cast %19 : vector<8x128xf32> to vector<1x8x128xf32>
      tpu.vector_store %arg5[%c0_10, %c0_11, %c0_12], %22 {strides = array<i32>} : memref<3x8x128xf32, #tpu.memory_space<vmem>>, vector<1x8x128xf32>,
      %c1 = arith.constant 1 : index
      %c0_13 = arith.constant 0 : index
      %c0_14 = arith.constant 0 : index
      %23 = vector.load %arg5[%c1, %c0_13, %c0_14] : memref<3x8x128xf32, #tpu.memory_space<vmem>>, vector<1x8x128xf32>
      %24 = vector.shape_cast %23 : vector<1x8x128xf32> to vector<8x128xf32>
      %25 = vector.shape_cast %13 : vector<16x128xf32> to vector<2x8x128xf32>
      %cst_15 = arith.constant dense<0.000000e+00> : vector<8x128xf32>
      %26 = vector.multi_reduction <add>, %25, %cst_15 [0] : vector<2x8x128xf32> to vector<8x128xf32>
      %27 = arith.addf %24, %26 : vector<8x128xf32>
      %c1_16 = arith.constant 1 : index
      %c0_17 = arith.constant 0 : index
      %c0_18 = arith.constant 0 : index
      %28 = vector.load %arg5[%c1_16, %c0_17, %c0_18] : memref<3x8x128xf32, #tpu.memory_space<vmem>>, vector<1x8x128xf32>
      %29 = vector.shape_cast %28 : vector<1x8x128xf32> to vector<8x128xf32>
      %30 = vector.shape_cast %27 : vector<8x128xf32> to vector<1x8x128xf32>
      tpu.vector_store %arg5[%c1_16, %c0_17, %c0_18], %30 {strides = array<i32>} : memref<3x8x128xf32, #tpu.memory_space<vmem>>, vector<1x8x128xf32>,
      %c2 = arith.constant 2 : index
      %c0_19 = arith.constant 0 : index
      %c0_20 = arith.constant 0 : index
      %31 = vector.load %arg5[%c2, %c0_19, %c0_20] : memref<3x8x128xf32, #tpu.memory_space<vmem>>, vector<1x8x128xf32>
      %32 = vector.shape_cast %31 : vector<1x8x128xf32> to vector<8x128xf32>
      %33 = arith.mulf %13, %13 : vector<16x128xf32>
      %34 = vector.shape_cast %33 : vector<16x128xf32> to vector<2x8x128xf32>
      %cst_21 = arith.constant dense<0.000000e+00> : vector<8x128xf32>
      %35 = vector.multi_reduction <add>, %34, %cst_21 [0] : vector<2x8x128xf32> to vector<8x128xf32>
      %36 = arith.addf %32, %35 : vector<8x128xf32>
      %c2_22 = arith.constant 2 : index
      %c0_23 = arith.constant 0 : index
      %c0_24 = arith.constant 0 : index
      %37 = vector.load %arg5[%c2_22, %c0_23, %c0_24] : memref<3x8x128xf32, #tpu.memory_space<vmem>>, vector<1x8x128xf32>
      %38 = vector.shape_cast %37 : vector<1x8x128xf32> to vector<8x128xf32>
      %39 = vector.shape_cast %36 : vector<8x128xf32> to vector<1x8x128xf32>
      tpu.vector_store %arg5[%c2_22, %c0_23, %c0_24], %39 {strides = array<i32>} : memref<3x8x128xf32, #tpu.memory_space<vmem>>, vector<1x8x128xf32>,
    } else {
    }
    return
  }
  func.func @transform_0(%arg0: i32, %arg1: i32) -> (i32, i32) {
    %c1_i32 = arith.constant 1 : i32
    %0 = arith.muli %arg0, %c1_i32 : i32
    %1 = arith.addi %0, %arg1 : i32
    %c0_i32 = arith.constant 0 : i32
    %2 = arith.minsi %1, %c0_i32 : i32
    %c0_i32_0 = arith.constant 0 : i32
    %c0_i32_1 = arith.constant 0 : i32
    return %2, %c0_i32_0 : i32, i32
  }
  func.func @transform_1(%arg0: i32, %arg1: i32) -> (i32, i32) {
    %c1_i32 = arith.constant 1 : i32
    %0 = arith.muli %arg0, %c1_i32 : i32
    %1 = arith.addi %0, %arg1 : i32
    %c0_i32 = arith.constant 0 : i32
    %2 = arith.minsi %1, %c0_i32 : i32
    %c0_i32_0 = arith.constant 0 : i32
    %c0_i32_1 = arith.constant 0 : i32
    return %2, %c0_i32_0 : i32, i32
  }
  func.func @transform_2(%arg0: i32, %arg1: i32) -> i32 {
    %c0_i32 = arith.constant 0 : i32
    %c0_i32_0 = arith.constant 0 : i32
    return %c0_i32 : i32
  }
  func.func @transform_3(%arg0: i32, %arg1: i32) -> (i32, i32, i32) {
    %c0_i32 = arith.constant 0 : i32
    %c0_i32_0 = arith.constant 0 : i32
    %c0_i32_1 = arith.constant 0 : i32
    return %arg0, %c0_i32, %c0_i32_0 : i32, i32, i32
  }
}

</mosaic_0001>

<llo_original>
// kernel: tpu_custom_call.1
$region0: #{tpu_custom_call.1}
  #allocation0 [shape = 'u32[]', space=smem, size = 0x4, offset = 0x4, fixed_abs, tag = 'smem constant byte address 0x4 - core index']
  #allocation1 [shape = 'u32[72,128]{1,0:T(1,128)}', space=vmem, size = 0x9000, scoped, tag = 'internal scratch']
  #allocation2 [shape = 'f32[1]{0:T(128)S(6)}', space=smem, size = 0x200, scoped, tag = 'scoped memory for tpu_custom_call.1']
  %s0 = inlined_call_operand.hbm [shape: f32[16,128], index: 0, kind: input, shape index: {}]
  %s1 = inlined_call_operand.hbm [shape: f32[16,128], index: 1, kind: input, shape index: {}]
  %s2 = inlined_call_operand.<no memory space> [shape: f32[1], index: 2, kind: input, shape index: {}]
  %s3 = inlined_call_operand.hbm [shape: f32[3,8,128], index: 3, kind: output, shape index: {}]
  %s4 = sld [smem:[#allocation0]]
  $region38: #{tpu_custom_call.1} parent=0
    _
  %s6 = ssub.s32 1, %s4
  %s7 = scalar_select 0, %s6, %s4
  %8 = sst [smem:[#allocation2]] %s2
  $region1: #{tpu_custom_call.1} parent=0
    #allocation3 [shape = 'u8[8192]{0}', space=vmem, size = 0x2000, scoped, tag = 'input window, operand 0, single buffered']
    #allocation4 [shape = 's32[1]{0}', space=sflag, size = 0x4, scoped, tag = 'scoped memory for tpu_custom_call.1']
    #allocation5 [shape = 's32[1]{0}', space=sflag, size = 0x4, scoped, tag = 'scoped memory for tpu_custom_call.1']
    #allocation6 [shape = 'u8[8192]{0}', space=vmem, size = 0x2000, scoped, tag = 'input window, operand 1, single buffered']
    #allocation7 [shape = 's32[1]{0}', space=sflag, size = 0x4, scoped, tag = 'scoped memory for tpu_custom_call.1']
    #allocation8 [shape = 'u8[12288]{0}', space=vmem, size = 0x3000, scoped, tag = 'output window, operand 0, single buffered']
    %9 = vsyncpa [#allocation4], 0
    %10 = vsyncpa [#allocation7], 0
    %11 = vsyncpa [#allocation5], 0
    // Predicated region
    $region2: #{tpu_custom_call.1} parent=1 // pred_check
      _
    $region3: #{tpu_custom_call.1} parent=1 // pred_check_branch
      %13 = sbr.rel (0) target = $region5
    $region4: #{tpu_custom_call.1} parent=1 // pred_region
      %s14 = sadd.s32 0, 0
      %p15 = scmp.lt.s32.totalorder %s14, 0
      %s16 = scalar_select %p15, %s14, 0
      %s17 = smul.u32 2, %s16
      %19 = vsyncadd [#allocation4], 0
      %s20 = smul.addr %s17, 8
      %s21 = scalar_lea.hbm %s0, %s20
      %s22 = sshll.u32 %s21, 4
      %s23 = int_to_ptr.hbm [resolvable:$true] %s22
      %s24 = sshll.u32 [#allocation3], 4
      %s25 = int_to_ptr.vmem [resolvable:$true] %s24
      %30 = dma.hbm_to_vmem [thread:$0]  %s23, 256, %s25, [#allocation4], 128, 128, 8
    $region5: #{tpu_custom_call.1} parent=1 // pred_fallthru
      _
    // Predicated region
    $region6: #{tpu_custom_call.1} parent=1 // pred_check
      _
    $region7: #{tpu_custom_call.1} parent=1 // pred_check_branch
      %32 = sbr.rel (0) target = $region9
    $region8: #{tpu_custom_call.1} parent=1 // pred_region
      %s33 = sadd.s32 0, 0
      %p34 = scmp.lt.s32.totalorder %s33, 0
      %s35 = scalar_select %p34, %s33, 0
      %s36 = smul.u32 2, %s35
      %38 = vsyncadd [#allocation7], 0
      %s39 = smul.addr %s36, 8
      %s40 = scalar_lea.hbm %s1, %s39
      %s41 = sshll.u32 %s40, 4
      %s42 = int_to_ptr.hbm [resolvable:$true] %s41
      %s43 = sshll.u32 [#allocation6], 4
      %s44 = int_to_ptr.vmem [resolvable:$true] %s43
      %49 = dma.hbm_to_vmem [thread:$0]  %s42, 256, %s44, [#allocation7], 128, 128, 8
    $region9: #{tpu_custom_call.1} parent=1 // pred_fallthru
      _
    // Predicated region
    $region10: #{tpu_custom_call.1} parent=1 // pred_check
      _
    $region11: #{tpu_custom_call.1} parent=1 // pred_check_branch
      %51 = sbr.rel (0) target = $region13
    $region12: #{tpu_custom_call.1} parent=1 // pred_region
      _
    $region13: #{tpu_custom_call.1} parent=1 // pred_fallthru
      _
    // Predicated region
    $region14: #{tpu_custom_call.1} parent=1 // pred_check
      _
    $region15: #{tpu_custom_call.1} parent=1 // pred_check_branch
      %53 = sbr.rel (0) target = $region17
    $region16: #{tpu_custom_call.1} parent=1 // pred_region
      %55 = dma.done [#allocation4], 256
    $region17: #{tpu_custom_call.1} parent=1 // pred_fallthru
      _
    // Predicated region
    $region18: #{tpu_custom_call.1} parent=1 // pred_check
      _
    $region19: #{tpu_custom_call.1} parent=1 // pred_check_branch
      %57 = sbr.rel (0) target = $region21
    $region20: #{tpu_custom_call.1} parent=1 // pred_region
      %59 = dma.done [#allocation7], 256
    $region21: #{tpu_custom_call.1} parent=1 // pred_fallthru
      _
    %s60 = sadd.s32 0, 0
    %p61 = scmp.lt.s32.totalorder %s60, 0
    %s62 = scalar_select %p61, %s60, 0
    %s63 = smul.u32 2, %s62
    %s64 = sadd.s32 0, 0
    %p65 = scmp.lt.s32.totalorder %s64, 0
    %s66 = scalar_select %p65, %s64, 0
    %s67 = smul.u32 2, %s66
    %s68 = sadd.s32 0, 0
    %p69 = scmp.eq.s32.totalorder 0, 0
    // Predicated region
    $region22: #{tpu_custom_call.1} parent=1 // pred_check
      %p70 = pneg %p69
    $region23: #{tpu_custom_call.1} parent=1 // pred_check_branch
      %72 = sbr.rel (%p70) target = $region25
    $region24: #{tpu_custom_call.1} parent=1 // pred_region
      %73 = vst [vmem:[#allocation8] sm:$0xff] 0.0
      %74 = vst [vmem:[#allocation8 + $0x8] sm:$0xff] 0.0
      %75 = vst [vmem:[#allocation8 + $0x10] sm:$0xff] 0.0
    $region25: #{tpu_custom_call.1} parent=1 // pred_fallthru
      _
    %s76 = sld [smem:[#allocation2]]
    %p77 = scmp.lt.s32.totalorder %s68, 1
    // Predicated region
    $region26: #{tpu_custom_call.1} parent=1 // pred_check
      %p78 = pneg %p77
    $region27: #{tpu_custom_call.1} parent=1 // pred_check_branch
      %80 = sbr.rel (%p78) target = $region29
    $region28: #{tpu_custom_call.1} parent=1 // pred_region
      %v81 = vld [vmem:[#allocation3] sm:$0xff]
      %v82 = vld [vmem:[#allocation3 + $0x8] sm:$0xff]
      %v83 = vld [vmem:[#allocation6] sm:$0xff]
      %v84 = vld [vmem:[#allocation6 + $0x8] sm:$0xff]
      %v85 = vsub.f32 %v83, %v81
      %v86 = vsub.f32 %v84, %v82
      %v87 = vstv %s76
      %v88 = vsub.f32 %v83, %v87
      %v89 = vsub.f32 %v84, %v87
      %v90 = vld [vmem:[#allocation8] sm:$0xff]
      %v91 = vmul.f32 %v85, %v85
      %v92 = vmul.f32 %v86, %v86
      %v93 = vadd.f32 %v91, %v92
      %v94 = vadd.f32 %v90, %v93
      %95 = vst [vmem:[#allocation8] sm:$0xff] %v94
      %s96 = scalar_lea.vmem [#allocation8], 8
      %v97 = vld [vmem:[%s96] sm:$0xff]
      %v98 = vadd.f32 %v88, %v89
      %v99 = vadd.f32 %v97, %v98
      %100 = vst [vmem:[%s96] sm:$0xff] %v99
      %s101 = scalar_lea.vmem [#allocation8], 16
      %v102 = vld [vmem:[%s101] sm:$0xff]
      %v103 = vmul.f32 %v88, %v88
      %v104 = vmul.f32 %v89, %v89
      %v105 = vadd.f32 %v103, %v104
      %v106 = vadd.f32 %v102, %v105
      %107 = vst [vmem:[%s101] sm:$0xff] %v106
    $region29: #{tpu_custom_call.1} parent=1 // pred_fallthru
      _
    // Predicated region
    $region30: #{tpu_custom_call.1} parent=1 // pred_check
      _
    $region31: #{tpu_custom_call.1} parent=1 // pred_check_branch
      %109 = sbr.rel (0) target = $region33
    $region32: #{tpu_custom_call.1} parent=1 // pred_region
      %111 = vsyncadd [#allocation5], 0
      %s112 = sshll.u32 [#allocation8], 4
      %s113 = int_to_ptr.vmem [resolvable:$true] %s112
      %s114 = sshll.u32 %s3, 4
      %s115 = int_to_ptr.hbm [resolvable:$true] %s114
      %120 = dma.vmem_to_hbm [thread:$0]  %s113, 384, %s115, [#allocation5], 128, 128, 8
    $region33: #{tpu_custom_call.1} parent=1 // pred_fallthru
      _
    // Predicated region
    $region34: #{tpu_custom_call.1} parent=1 // pred_check
      _
    $region35: #{tpu_custom_call.1} parent=1 // pred_check_branch
      %122 = sbr.rel (0) target = $region37
    $region36: #{tpu_custom_call.1} parent=1 // pred_region
      %124 = dma.done [#allocation5], 384
    $region37: #{tpu_custom_call.1} parent=1 // pred_fallthru
      _
    %125 = vsyncpa [#allocation4], 1
    %126 = vsyncpa [#allocation7], 1
    %127 = vsyncpa [#allocation5], 1

</llo_original>
